<compile_context>
chip_gen: v7x
topology: tpu7x:2x2x1
jax: 0.10.0
libtpu: 0.0.40
codegen_flags: <defaults>
</compile_context>

<pallas_src>
import functools
import math

import jax
import jax.numpy as jnp
from jax.experimental import pallas as pl
from jax.experimental.pallas import tpu as pltpu

_SQRT_2_OVER_PI = math.sqrt(2.0 / math.pi)
_COEF3 = _SQRT_2_OVER_PI * 0.044715


def _gelu_kernel(x_ref, o_ref, *, compute_dtype):
    x = x_ref[...].astype(compute_dtype)
    # Factored polynomial (fewer VALU ops, FMA-friendly):
    #   c*x + c*0.044715*x^3  ==  x * (c + c3 * x*x)
    inner = x * (_SQRT_2_OVER_PI + _COEF3 * (x * x))
    y = (0.5 * x) * (1.0 + jnp.tanh(inner))      # tanh runs on the EUP slot
    o_ref[...] = y.astype(o_ref.dtype)


def _gelu_jnp(x):
    """Pure-jnp reference / tail path, identical math to the PyTorch module."""
    xf = x.astype(jnp.float32)
    y = 0.5 * xf * (1.0 + jnp.tanh(
        _SQRT_2_OVER_PI * (xf + 0.044715 * xf ** 3)))
    return y.astype(x.dtype)


def _chip_config():
    """(target_block_bytes, vmem_limit_bytes, bf16_native_compute) per chip."""
    try:
        kind = jax.devices()[0].device_kind.lower()
    except Exception:
        kind = ""
    if "v5e" in kind or "v5 lite" in kind or "v5lite" in kind:
        # v5e: default scoped VMEM is 16 MiB -> must raise the cap for the
        # double-buffered 4 MiB blocks; no bf16 VPU/EUP, keep f32 compute.
        return 4 << 20, 32 << 20, False
    if "v7" in kind:
        # v7x: 64 MiB physical VMEM -> 8 MiB blocks, 48 MiB cap leaves headroom
        # for compiler scratch; bf16 VPU/EUP available.
        return 8 << 20, 48 << 20, True
    # v6e / v5p / unknown: plenty of VMEM; 8 MiB blocks amortize step overhead.
    return 8 << 20, 64 << 20, True


def _choose_cols(total):
    """Widest multiple-of-128 last dim dividing `total`, preferring >=8 rows."""
    best_any = None
    for c in (4096, 2048, 1024, 512, 256, 128):
        if total % c == 0:
            if best_any is None:
                best_any = c
            if total // c >= 8:
                return c
    return best_any  # total is 128-aligned when we get here, so never None


def _choose_tm(rows, bytes_per_row, target_block_bytes, mult):
    """Row-tile: ~target_block_bytes, sublane-aligned, pipeline-friendly."""
    if rows <= mult:
        return rows                              # single full-extent block
    total_bytes = rows * bytes_per_row
    tm = max(mult, (max(1, target_block_bytes // bytes_per_row) // mult) * mult)
    # Never collapse to a single (or too-short) grid: >=4 steps for >1 MiB so
    # DMA-in / compute / DMA-out overlap and the parallel axis can shard.
    if total_bytes > (1 << 20):
        cap = (rows // 4 // mult) * mult
        if cap >= mult:
            tm = min(tm, cap)
    tm = min(tm, rows)
    if tm < rows:
        tm = max(mult, (tm // mult) * mult)      # BlockSpec sublane alignment
    # Short grids: prefer a tm that divides rows exactly (no masked edge block)
    # with an even block count (clean 2-TensorCore split on v7x).
    nblk = pl.cdiv(rows, tm)
    if 1 < nblk <= 32 and (rows % tm != 0 or nblk % 2 != 0):
        best = None
        cand = tm
        while cand >= mult and cand * 4 >= tm:   # don't shrink blocks > 4x
            if rows % cand == 0:
                nb = rows // cand
                if nb % 2 == 0:
                    best = cand
                    break
                if best is None:
                    best = cand
            cand -= mult
        if best is not None:
            tm = best
    return tm


def _gelu_bulk(flat, target_block_bytes, vmem_limit_bytes, bf16_native):
    """Run the Pallas kernel on a flat array whose size is a multiple of 128."""
    total = int(flat.size)
    dtype = flat.dtype
    itemsize = jnp.dtype(dtype).itemsize

    cols = _choose_cols(total)
    rows = total // cols
    x2d = jnp.reshape(flat, (rows, cols))        # free reshape, no data movement

    mult = 8 * max(1, 4 // itemsize)             # sublane multiple (8 f32, 16 bf16)
    tm = _choose_tm(rows, cols * itemsize, target_block_bytes, mult)
    grid = (pl.cdiv(rows, tm),)

    compute_dtype = dtype if (bf16_native and dtype == jnp.bfloat16) else jnp.float32
    kernel = functools.partial(_gelu_kernel, compute_dtype=compute_dtype)

    cost = pl.CostEstimate(
        flops=9 * total,
        transcendentals=total,
        bytes_accessed=2 * total * itemsize,
    )

    out2d = pl.pallas_call(
        kernel,
        out_shape=jax.ShapeDtypeStruct((rows, cols), dtype),
        grid_spec=pltpu.PrefetchScalarGridSpec(
            num_scalar_prefetch=0,
            grid=grid,
            in_specs=[pl.BlockSpec((tm, cols), lambda i: (i, 0))],
            out_specs=pl.BlockSpec((tm, cols), lambda i: (i, 0)),
        ),
        compiler_params=pltpu.CompilerParams(
            dimension_semantics=("parallel",),    # shards across TCs on v7x
            vmem_limit_bytes=vmem_limit_bytes,
        ),
        cost_estimate=cost,
    )(x2d)
    return out2d.reshape(-1)


def gelu(x):
    """Elementwise GELU (tanh approx), matching the PyTorch module exactly."""
    orig_shape = x.shape
    total = int(x.size)
    if total == 0:
        return x
    target_block_bytes, vmem_limit_bytes, bf16_native = _chip_config()

    if total % 128 == 0:
        # Common case: free reshape, zero extra HBM traffic.
        flat = jnp.reshape(x, (total,))
        out = _gelu_bulk(flat, target_block_bytes, vmem_limit_bytes, bf16_native)
        return out.reshape(orig_shape)

    # Rare remainder case: kernel on the 128-aligned bulk, tiny (<128 elem)
    # tail with plain jnp — avoids whole-array pad + slice copies.
    flat = jnp.ravel(x)
    bulk = total - (total % 128)
    pieces = []
    if bulk > 0:
        pieces.append(_gelu_bulk(flat[:bulk], target_block_bytes,
                                 vmem_limit_bytes, bf16_native))
    pieces.append(_gelu_jnp(flat[bulk:]))
    return jnp.concatenate(pieces).reshape(orig_shape)


if __name__ == "__main__":
    key = jax.random.PRNGKey(0)
    x = jax.random.normal(key, (2, 4, 16, 16), dtype=jnp.float32)

    out = gelu(x)
    jax.block_until_ready(out)

    ref = _gelu_jnp(x)
    assert out.shape == x.shape and out.dtype == x.dtype
    assert jnp.allclose(out, ref, atol=1e-5, rtol=1e-5)
    print("KERNEL_OK")
</pallas_src>

<mosaic_0001>
module attributes {stable_mosaic.version = 11 : i64} {
  func.func @_gelu_kernel(%arg0: i32, %arg1: memref<8x256xf32, #tpu.memory_space<vmem>>, %arg2: memref<8x256xf32, #tpu.memory_space<vmem>>) attributes {dimension_semantics = [#tpu.dimension_semantics<parallel>], iteration_bounds = array<i64: 1>, scalar_prefetch = 0 : i64, scratch_operands = 0 : i64, tpu.core_type = #tpu.core_type<tc>, window_params = [{transform_indices = @transform_0, window_bounds = array<i64: 8, 256>}, {transform_indices = @transform_1, window_bounds = array<i64: 8, 256>}]} {
    %c0 = arith.constant 0 : index
    %c0_0 = arith.constant 0 : index
    %0 = vector.load %arg1[%c0, %c0_0] : memref<8x256xf32, #tpu.memory_space<vmem>>, vector<8x256xf32>
    %1 = arith.mulf %0, %0 : vector<8x256xf32>
    %cst = arith.constant 0.0356774069 : f32
    %2 = vector.broadcast %cst : f32 to vector<8x256xf32>
    %3 = arith.mulf %2, %1 : vector<8x256xf32>
    %cst_1 = arith.constant 0.797884583 : f32
    %4 = vector.broadcast %cst_1 : f32 to vector<8x256xf32>
    %5 = arith.addf %4, %3 : vector<8x256xf32>
    %6 = arith.mulf %0, %5 : vector<8x256xf32>
    %cst_2 = arith.constant 5.000000e-01 : f32
    %7 = vector.broadcast %cst_2 : f32 to vector<8x256xf32>
    %8 = arith.mulf %7, %0 : vector<8x256xf32>
    %9 = math.tanh %6 : vector<8x256xf32>
    %cst_3 = arith.constant 1.000000e+00 : f32
    %10 = vector.broadcast %cst_3 : f32 to vector<8x256xf32>
    %11 = arith.addf %10, %9 : vector<8x256xf32>
    %12 = arith.mulf %8, %11 : vector<8x256xf32>
    %c0_4 = arith.constant 0 : index
    %c0_5 = arith.constant 0 : index
    %13 = vector.load %arg2[%c0_4, %c0_5] : memref<8x256xf32, #tpu.memory_space<vmem>>, vector<8x256xf32>
    tpu.vector_store %arg2[%c0_4, %c0_5], %12 {strides = array<i32>} : memref<8x256xf32, #tpu.memory_space<vmem>>, vector<8x256xf32>,
    return
  }
  func.func @transform_0(%arg0: i32) -> (i32, i32) {
    %c0_i32 = arith.constant 0 : i32
    %c0_i32_0 = arith.constant 0 : i32
    return %arg0, %c0_i32 : i32, i32
  }
  func.func @transform_1(%arg0: i32) -> (i32, i32) {
    %c0_i32 = arith.constant 0 : i32
    %c0_i32_0 = arith.constant 0 : i32
    return %arg0, %c0_i32 : i32, i32
  }
}

</mosaic_0001>

<llo_original>
// kernel: tpu_custom_call.1
$region0: #{tpu_custom_call.1}
  #allocation0 [shape = 'u32[]', space=smem, size = 0x4, offset = 0x4, fixed_abs, tag = 'smem constant byte address 0x4 - core index']
  #allocation1 [shape = 'u32[144,128]{1,0:T(1,128)}', space=vmem, size = 0x12000, scoped, tag = 'internal scratch']
  %s0 = inlined_call_operand.hbm [shape: f32[8,256], index: 0, kind: input, shape index: {}]
  %s1 = inlined_call_operand.hbm [shape: f32[8,256], index: 1, kind: output, shape index: {}]
  %s2 = sld [smem:[#allocation0]]
  $region18: #{tpu_custom_call.1} parent=0
    _
  %s4 = ssub.s32 1, %s2
  %s5 = scalar_select 0, %s4, %s2
  $region1: #{tpu_custom_call.1} parent=0
    #allocation2 [shape = 'u8[8192]{0}', space=vmem, size = 0x2000, scoped, tag = 'input window, operand 0, single buffered']
    #allocation3 [shape = 's32[1]{0}', space=sflag, size = 0x4, scoped, tag = 'scoped memory for tpu_custom_call.1']
    #allocation4 [shape = 's32[1]{0}', space=sflag, size = 0x4, scoped, tag = 'scoped memory for tpu_custom_call.1']
    #allocation5 [shape = 'u8[8192]{0}', space=vmem, size = 0x2000, scoped, tag = 'output window, operand 0, single buffered']
    %6 = vsyncpa [#allocation3], 0
    %7 = vsyncpa [#allocation4], 0
    // Predicated region
    $region2: #{tpu_custom_call.1} parent=1 // pred_check
      _
    $region3: #{tpu_custom_call.1} parent=1 // pred_check_branch
      %9 = sbr.rel (0) target = $region5
    $region4: #{tpu_custom_call.1} parent=1 // pred_region
      %s11 = ssub.s32 256, 256
      %12 = vsyncadd [#allocation3], %s11
      %s14 = sshll.u32 [#allocation2], 4
      %s15 = int_to_ptr.vmem [resolvable:$true] %s14
      %17 = dma.hbm_to_vmem [thread:$0]  %s0, 256, %s15, [#allocation3]
    $region5: #{tpu_custom_call.1} parent=1 // pred_fallthru
      _
    // Predicated region
    $region6: #{tpu_custom_call.1} parent=1 // pred_check
      _
    $region7: #{tpu_custom_call.1} parent=1 // pred_check_branch
      %19 = sbr.rel (0) target = $region9
    $region8: #{tpu_custom_call.1} parent=1 // pred_region
      %20 = dma.done [#allocation3], 256
    $region9: #{tpu_custom_call.1} parent=1 // pred_fallthru
      _
    %v21 = vld [vmem:[#allocation2] sm:$0xff]
    %v22 = vld [vmem:[#allocation2 + $0x8] sm:$0xff]
    %v23 = vmul.f32 %v21, %v21
    %v24 = vmul.f32 %v22, %v22
    %v25 = vmul.f32 %v23, 0.035677407
    %v26 = vmul.f32 %v24, 0.035677407
    %v27 = vadd.f32 %v25, 0.7978846
    %v28 = vadd.f32 %v26, 0.7978846
    %v29 = vmul.f32 %v21, %v27
    %v30 = vmul.f32 %v22, %v28
    %v31 = vmul.f32 %v21, 0.5
    %v32 = vmul.f32 %v22, 0.5
    %v33 = vtanh.pop %v29
    %v34 = vtanh.pop %v30
    %v35 = vadd.f32 %v33, 1.0
    %v36 = vadd.f32 %v34, 1.0
    %v37 = vmul.f32 %v31, %v35
    %v38 = vmul.f32 %v32, %v36
    %39 = vst [vmem:[#allocation5] sm:$0xff] %v37
    %40 = vst [vmem:[#allocation5 + $0x8] sm:$0xff] %v38
    // Predicated region
    $region10: #{tpu_custom_call.1} parent=1 // pred_check
      _
    $region11: #{tpu_custom_call.1} parent=1 // pred_check_branch
      %42 = sbr.rel (0) target = $region13
    $region12: #{tpu_custom_call.1} parent=1 // pred_region
      %s44 = ssub.s32 256, 256
      %45 = vsyncadd [#allocation4], %s44
      %s47 = sshll.u32 [#allocation5], 4
      %s48 = int_to_ptr.vmem [resolvable:$true] %s47
      %50 = dma.vmem_to_hbm [thread:$0]  %s48, 256, %s1, [#allocation4]
    $region13: #{tpu_custom_call.1} parent=1 // pred_fallthru
      _
    // Predicated region
    $region14: #{tpu_custom_call.1} parent=1 // pred_check
      _
    $region15: #{tpu_custom_call.1} parent=1 // pred_check_branch
      %52 = sbr.rel (0) target = $region17
    $region16: #{tpu_custom_call.1} parent=1 // pred_region
      %53 = dma.done [#allocation4], 256
    $region17: #{tpu_custom_call.1} parent=1 // pred_fallthru
      _
    %54 = vsyncpa [#allocation3], 1
    %55 = vsyncpa [#allocation4], 1

</llo_original>
